<compile_context>
chip_gen: v7x
topology: tpu7x:2x2x1
jax: 0.10.0
libtpu: 0.0.40
codegen_flags: <defaults>
</compile_context>

<pallas_src>
import jax
import jax.numpy as jnp
import numpy as np
from jax.experimental import pallas as pl
from jax.experimental.pallas import tpu as pltpu

INPUT_SIZE = 1
HIDDEN = 32


def _rnn_kernel(x_ref, h0_ref, wih_row_ref, whh_t_ref, bias_ref,
                wout_row_ref, bout_ref, y_ref, hn_ref, buf):
    """Single-invocation RNN kernel.

    x_ref:        (B, T, 1)  VMEM   batch-first inputs
    h0_ref:       (B, H)     VMEM   initial hidden state
    wih_row_ref:  (1, H)     VMEM   W_ih^T (I == 1 -> single row)
    whh_t_ref:    (H, H)     VMEM   W_hh^T
    bias_ref:     (1, H)     VMEM   b_ih + b_hh (pre-summed once)
    wout_row_ref: (1, H)     VMEM   W_out (row vector)
    bout_ref:     (1, 1)     SMEM   b_out scalar
    y_ref:        (B, T)     VMEM   per-step outputs (T on lanes)
    hn_ref:       (B, H)     VMEM   final hidden state
    buf:          (B, T, H)  VMEM   scratch: staged input proj, then h_t
    """
    T = x_ref.shape[1]

    # Hoisted input projection + biases for every step at once (VPU broadcast):
    #   buf[:, t, :] = x[:, t, 0] * W_ih_row + (b_ih + b_hh)
    buf[...] = x_ref[...] * wih_row_ref[...][None] + bias_ref[...][None]

    whh_t = whh_t_ref[...]          # (H, H), hoisted out of the loop
    h = h0_ref[...]                 # (B, H)

    # Fully-unrolled recurrence: only the matmul + tanh is truly sequential.
    for t in range(T):
        h = jnp.tanh(buf[:, t, :] +
                     jnp.dot(h, whh_t, preferred_element_type=jnp.float32))
        buf[:, t, :] = h            # reuse the staging scratch to hold h_t

    hn_ref[...] = h.astype(hn_ref.dtype)

    # Deferred output projection: one broadcast-multiply + lane reduction over
    # all (B, T) positions, then a single lane-dense writeback.
    h_all = buf[...]                                          # (B, T, H)
    y = jnp.sum(h_all * wout_row_ref[...][None], axis=-1)     # (B, T)
    y_ref[...] = (y + bout_ref[0, 0]).astype(y_ref.dtype)


def rnn_forward(x, h_state, params):
    """x: (B, T, I) f32, h_state: (1, B, H) f32 or None.

    Returns (y, h_n) with y: (B, T, 1), h_n: (1, B, H) — same as the PyTorch
    module's forward.
    """
    B, T, I = x.shape
    assert I == INPUT_SIZE
    H = HIDDEN
    if h_state is None:
        h_state = jnp.zeros((1, B, H), dtype=jnp.float32)

    W_ih, W_hh, b_ih, b_hh, W_out, b_out = params

    # Plain-JAX layout plumbing only (no per-step arithmetic moved out).
    x_f32 = x.astype(jnp.float32)                        # (B, T, 1)
    h0 = h_state[0].astype(jnp.float32)                  # (B, H)
    wih_row = W_ih.reshape(1, H).astype(jnp.float32)     # W_ih is (H, 1)
    whh_t = W_hh.T.astype(jnp.float32)                   # (H, H)
    bias = (b_ih + b_hh).reshape(1, H).astype(jnp.float32)
    wout_row = W_out.reshape(1, H).astype(jnp.float32)   # W_out is (1, H)
    bout = b_out.reshape(1, 1).astype(jnp.float32)

    vmem = pl.BlockSpec(memory_space=pltpu.MemorySpace.VMEM)
    smem = pl.BlockSpec(memory_space=pltpu.MemorySpace.SMEM)

    y2d, h_n = pl.pallas_call(
        _rnn_kernel,
        out_shape=(
            jax.ShapeDtypeStruct((B, T), jnp.float32),   # y (lane-dense)
            jax.ShapeDtypeStruct((B, H), jnp.float32),   # h_n
        ),
        in_specs=[vmem, vmem, vmem, vmem, vmem, vmem, smem],
        out_specs=(vmem, vmem),
        scratch_shapes=[pltpu.VMEM((B, T, H), jnp.float32)],
    )(x_f32, h0, wih_row, whh_t, bias, wout_row, bout)

    y = y2d[:, :, None].astype(x.dtype)                  # (B, T, 1)
    return y, h_n[None].astype(x.dtype)                  # (1, B, H)


def init_params(key):
    """Deterministic init matching PyTorch shapes (U(-1/sqrt(H), 1/sqrt(H)))."""
    H, I = HIDDEN, INPUT_SIZE
    bound = 1.0 / np.sqrt(H)
    ks = jax.random.split(key, 6)
    W_ih = jax.random.uniform(ks[0], (H, I), jnp.float32, -bound, bound)
    W_hh = jax.random.uniform(ks[1], (H, H), jnp.float32, -bound, bound)
    b_ih = jax.random.uniform(ks[2], (H,), jnp.float32, -bound, bound)
    b_hh = jax.random.uniform(ks[3], (H,), jnp.float32, -bound, bound)
    W_out = jax.random.uniform(ks[4], (1, H), jnp.float32, -bound, bound)
    b_out = jax.random.uniform(ks[5], (1,), jnp.float32, -bound, bound)
    return (W_ih, W_hh, b_ih, b_hh, W_out, b_out)


def reference_forward(x, h_state, params):
    """Pure-JAX reference (lax.scan) for correctness checking."""
    W_ih, W_hh, b_ih, b_hh, W_out, b_out = params
    B = x.shape[0]
    if h_state is None:
        h_state = jnp.zeros((1, B, HIDDEN), dtype=x.dtype)

    def step(h, x_t):
        h_new = jnp.tanh(x_t @ W_ih.T + b_ih + h @ W_hh.T + b_hh)
        y_t = h_new @ W_out.T + b_out
        return h_new, y_t

    h_final, ys = jax.lax.scan(step, h_state[0], jnp.swapaxes(x, 0, 1))
    return jnp.swapaxes(ys, 0, 1), h_final[None]


if __name__ == "__main__":
    key = jax.random.PRNGKey(0)
    k_param, k_x = jax.random.split(key)

    B, T = 2, 8
    params = init_params(k_param)
    x = jax.random.normal(k_x, (B, T, INPUT_SIZE), dtype=jnp.float32)
    h_state = None  # matches the global `h_state = None` in the PyTorch demo

    y, h_n = rnn_forward(x, h_state, params)
    y = jax.block_until_ready(y)
    h_n = jax.block_until_ready(h_n)

    y_ref, h_ref = reference_forward(x, h_state, params)
    np.testing.assert_allclose(np.asarray(y), np.asarray(y_ref), rtol=1e-5, atol=1e-5)
    np.testing.assert_allclose(np.asarray(h_n), np.asarray(h_ref), rtol=1e-5, atol=1e-5)
    assert y.shape == (B, T, 1) and h_n.shape == (1, B, HIDDEN)

    print("KERNEL_OK")
</pallas_src>

<mosaic_0001>
module attributes {stable_mosaic.version = 11 : i64} {
  func.func @_rnn_kernel(%arg0: memref<2x8x1xf32, #tpu.memory_space<vmem>>, %arg1: memref<2x32xf32, #tpu.memory_space<vmem>>, %arg2: memref<1x32xf32, #tpu.memory_space<vmem>>, %arg3: memref<32x32xf32, #tpu.memory_space<vmem>>, %arg4: memref<1x32xf32, #tpu.memory_space<vmem>>, %arg5: memref<1x32xf32, #tpu.memory_space<vmem>>, %arg6: memref<1x1xf32, #tpu.memory_space<smem>>, %arg7: memref<2x8xf32, #tpu.memory_space<vmem>>, %arg8: memref<2x32xf32, #tpu.memory_space<vmem>>, %arg9: memref<2x8x32xf32, #tpu.memory_space<vmem>>) attributes {dimension_semantics = [], scalar_prefetch = 0 : i64, scratch_operands = 1 : i64, tpu.core_type = #tpu.core_type<tc>} {
    %c0 = arith.constant 0 : index
    %c0_0 = arith.constant 0 : index
    %c0_1 = arith.constant 0 : index
    %0 = vector.load %arg0[%c0, %c0_0, %c0_1] : memref<2x8x1xf32, #tpu.memory_space<vmem>>, vector<2x8x1xf32>
    %c0_2 = arith.constant 0 : index
    %c0_3 = arith.constant 0 : index
    %1 = vector.load %arg2[%c0_2, %c0_3] : memref<1x32xf32, #tpu.memory_space<vmem>>, vector<1x32xf32>
    %2 = vector.shape_cast %1 : vector<1x32xf32> to vector<1x1x32xf32>
    %3 = vector.broadcast %0 : vector<2x8x1xf32> to vector<2x8x32xf32>
    %4 = vector.broadcast %2 : vector<1x1x32xf32> to vector<2x8x32xf32>
    %5 = arith.mulf %3, %4 : vector<2x8x32xf32>
    %c0_4 = arith.constant 0 : index
    %c0_5 = arith.constant 0 : index
    %6 = vector.load %arg4[%c0_4, %c0_5] : memref<1x32xf32, #tpu.memory_space<vmem>>, vector<1x32xf32>
    %7 = vector.shape_cast %6 : vector<1x32xf32> to vector<1x1x32xf32>
    %8 = vector.broadcast %7 : vector<1x1x32xf32> to vector<2x8x32xf32>
    %9 = arith.addf %5, %8 : vector<2x8x32xf32>
    %c0_6 = arith.constant 0 : index
    %c0_7 = arith.constant 0 : index
    %c0_8 = arith.constant 0 : index
    %10 = vector.load %arg9[%c0_6, %c0_7, %c0_8] : memref<2x8x32xf32, #tpu.memory_space<vmem>>, vector<2x8x32xf32>
    tpu.vector_store %arg9[%c0_6, %c0_7, %c0_8], %9 {strides = array<i32>} : memref<2x8x32xf32, #tpu.memory_space<vmem>>, vector<2x8x32xf32>,
    %c0_9 = arith.constant 0 : index
    %c0_10 = arith.constant 0 : index
    %11 = vector.load %arg3[%c0_9, %c0_10] : memref<32x32xf32, #tpu.memory_space<vmem>>, vector<32x32xf32>
    %c0_11 = arith.constant 0 : index
    %c0_12 = arith.constant 0 : index
    %12 = vector.load %arg1[%c0_11, %c0_12] : memref<2x32xf32, #tpu.memory_space<vmem>>, vector<2x32xf32>
    %c0_13 = arith.constant 0 : index
    %c0_14 = arith.constant 0 : index
    %c0_15 = arith.constant 0 : index
    %13 = vector.load %arg9[%c0_13, %c0_14, %c0_15] : memref<2x8x32xf32, #tpu.memory_space<vmem>>, vector<2x1x32xf32>
    %14 = vector.shape_cast %13 : vector<2x1x32xf32> to vector<2x32xf32>
    %cst = arith.constant dense<0.000000e+00> : vector<2x32xf32>
    %15 = tpu.matmul %12, %11, %cst {dimension_numbers = #tpu.dot_dimension_numbers<[1], [0], [0], [1], [0, 0, 1, 1], [], []>} : vector<2x32xf32>, vector<32x32xf32>, vector<2x32xf32> -> vector<2x32xf32>
    %16 = arith.addf %14, %15 : vector<2x32xf32>
    %17 = math.tanh %16 : vector<2x32xf32>
    %c0_16 = arith.constant 0 : index
    %c0_17 = arith.constant 0 : index
    %c0_18 = arith.constant 0 : index
    %18 = vector.load %arg9[%c0_16, %c0_17, %c0_18] : memref<2x8x32xf32, #tpu.memory_space<vmem>>, vector<2x1x32xf32>
    %19 = vector.shape_cast %18 : vector<2x1x32xf32> to vector<2x32xf32>
    %20 = vector.shape_cast %17 : vector<2x32xf32> to vector<2x1x32xf32>
    tpu.vector_store %arg9[%c0_16, %c0_17, %c0_18], %20 {strides = array<i32>} : memref<2x8x32xf32, #tpu.memory_space<vmem>>, vector<2x1x32xf32>,
    %c0_19 = arith.constant 0 : index
    %c1 = arith.constant 1 : index
    %c0_20 = arith.constant 0 : index
    %21 = vector.load %arg9[%c0_19, %c1, %c0_20] : memref<2x8x32xf32, #tpu.memory_space<vmem>>, vector<2x1x32xf32>
    %22 = vector.shape_cast %21 : vector<2x1x32xf32> to vector<2x32xf32>
    %cst_21 = arith.constant dense<0.000000e+00> : vector<2x32xf32>
    %23 = tpu.matmul %17, %11, %cst_21 {dimension_numbers = #tpu.dot_dimension_numbers<[1], [0], [0], [1], [0, 0, 1, 1], [], []>} : vector<2x32xf32>, vector<32x32xf32>, vector<2x32xf32> -> vector<2x32xf32>
    %24 = arith.addf %22, %23 : vector<2x32xf32>
    %25 = math.tanh %24 : vector<2x32xf32>
    %c0_22 = arith.constant 0 : index
    %c1_23 = arith.constant 1 : index
    %c0_24 = arith.constant 0 : index
    %26 = vector.load %arg9[%c0_22, %c1_23, %c0_24] : memref<2x8x32xf32, #tpu.memory_space<vmem>>, vector<2x1x32xf32>
    %27 = vector.shape_cast %26 : vector<2x1x32xf32> to vector<2x32xf32>
    %28 = vector.shape_cast %25 : vector<2x32xf32> to vector<2x1x32xf32>
    tpu.vector_store %arg9[%c0_22, %c1_23, %c0_24], %28 {strides = array<i32>} : memref<2x8x32xf32, #tpu.memory_space<vmem>>, vector<2x1x32xf32>,
    %c0_25 = arith.constant 0 : index
    %c2 = arith.constant 2 : index
    %c0_26 = arith.constant 0 : index
    %29 = vector.load %arg9[%c0_25, %c2, %c0_26] : memref<2x8x32xf32, #tpu.memory_space<vmem>>, vector<2x1x32xf32>
    %30 = vector.shape_cast %29 : vector<2x1x32xf32> to vector<2x32xf32>
    %cst_27 = arith.constant dense<0.000000e+00> : vector<2x32xf32>
    %31 = tpu.matmul %25, %11, %cst_27 {dimension_numbers = #tpu.dot_dimension_numbers<[1], [0], [0], [1], [0, 0, 1, 1], [], []>} : vector<2x32xf32>, vector<32x32xf32>, vector<2x32xf32> -> vector<2x32xf32>
    %32 = arith.addf %30, %31 : vector<2x32xf32>
    %33 = math.tanh %32 : vector<2x32xf32>
    %c0_28 = arith.constant 0 : index
    %c2_29 = arith.constant 2 : index
    %c0_30 = arith.constant 0 : index
    %34 = vector.load %arg9[%c0_28, %c2_29, %c0_30] : memref<2x8x32xf32, #tpu.memory_space<vmem>>, vector<2x1x32xf32>
    %35 = vector.shape_cast %34 : vector<2x1x32xf32> to vector<2x32xf32>
    %36 = vector.shape_cast %33 : vector<2x32xf32> to vector<2x1x32xf32>
    tpu.vector_store %arg9[%c0_28, %c2_29, %c0_30], %36 {strides = array<i32>} : memref<2x8x32xf32, #tpu.memory_space<vmem>>, vector<2x1x32xf32>,
    %c0_31 = arith.constant 0 : index
    %c3 = arith.constant 3 : index
    %c0_32 = arith.constant 0 : index
    %37 = vector.load %arg9[%c0_31, %c3, %c0_32] : memref<2x8x32xf32, #tpu.memory_space<vmem>>, vector<2x1x32xf32>
    %38 = vector.shape_cast %37 : vector<2x1x32xf32> to vector<2x32xf32>
    %cst_33 = arith.constant dense<0.000000e+00> : vector<2x32xf32>
    %39 = tpu.matmul %33, %11, %cst_33 {dimension_numbers = #tpu.dot_dimension_numbers<[1], [0], [0], [1], [0, 0, 1, 1], [], []>} : vector<2x32xf32>, vector<32x32xf32>, vector<2x32xf32> -> vector<2x32xf32>
    %40 = arith.addf %38, %39 : vector<2x32xf32>
    %41 = math.tanh %40 : vector<2x32xf32>
    %c0_34 = arith.constant 0 : index
    %c3_35 = arith.constant 3 : index
    %c0_36 = arith.constant 0 : index
    %42 = vector.load %arg9[%c0_34, %c3_35, %c0_36] : memref<2x8x32xf32, #tpu.memory_space<vmem>>, vector<2x1x32xf32>
    %43 = vector.shape_cast %42 : vector<2x1x32xf32> to vector<2x32xf32>
    %44 = vector.shape_cast %41 : vector<2x32xf32> to vector<2x1x32xf32>
    tpu.vector_store %arg9[%c0_34, %c3_35, %c0_36], %44 {strides = array<i32>} : memref<2x8x32xf32, #tpu.memory_space<vmem>>, vector<2x1x32xf32>,
    %c0_37 = arith.constant 0 : index
    %c4 = arith.constant 4 : index
    %c0_38 = arith.constant 0 : index
    %45 = vector.load %arg9[%c0_37, %c4, %c0_38] : memref<2x8x32xf32, #tpu.memory_space<vmem>>, vector<2x1x32xf32>
    %46 = vector.shape_cast %45 : vector<2x1x32xf32> to vector<2x32xf32>
    %cst_39 = arith.constant dense<0.000000e+00> : vector<2x32xf32>
    %47 = tpu.matmul %41, %11, %cst_39 {dimension_numbers = #tpu.dot_dimension_numbers<[1], [0], [0], [1], [0, 0, 1, 1], [], []>} : vector<2x32xf32>, vector<32x32xf32>, vector<2x32xf32> -> vector<2x32xf32>
    %48 = arith.addf %46, %47 : vector<2x32xf32>
    %49 = math.tanh %48 : vector<2x32xf32>
    %c0_40 = arith.constant 0 : index
    %c4_41 = arith.constant 4 : index
    %c0_42 = arith.constant 0 : index
    %50 = vector.load %arg9[%c0_40, %c4_41, %c0_42] : memref<2x8x32xf32, #tpu.memory_space<vmem>>, vector<2x1x32xf32>
    %51 = vector.shape_cast %50 : vector<2x1x32xf32> to vector<2x32xf32>
    %52 = vector.shape_cast %49 : vector<2x32xf32> to vector<2x1x32xf32>
    tpu.vector_store %arg9[%c0_40, %c4_41, %c0_42], %52 {strides = array<i32>} : memref<2x8x32xf32, #tpu.memory_space<vmem>>, vector<2x1x32xf32>,
    %c0_43 = arith.constant 0 : index
    %c5 = arith.constant 5 : index
    %c0_44 = arith.constant 0 : index
    %53 = vector.load %arg9[%c0_43, %c5, %c0_44] : memref<2x8x32xf32, #tpu.memory_space<vmem>>, vector<2x1x32xf32>
    %54 = vector.shape_cast %53 : vector<2x1x32xf32> to vector<2x32xf32>
    %cst_45 = arith.constant dense<0.000000e+00> : vector<2x32xf32>
    %55 = tpu.matmul %49, %11, %cst_45 {dimension_numbers = #tpu.dot_dimension_numbers<[1], [0], [0], [1], [0, 0, 1, 1], [], []>} : vector<2x32xf32>, vector<32x32xf32>, vector<2x32xf32> -> vector<2x32xf32>
    %56 = arith.addf %54, %55 : vector<2x32xf32>
    %57 = math.tanh %56 : vector<2x32xf32>
    %c0_46 = arith.constant 0 : index
    %c5_47 = arith.constant 5 : index
    %c0_48 = arith.constant 0 : index
    %58 = vector.load %arg9[%c0_46, %c5_47, %c0_48] : memref<2x8x32xf32, #tpu.memory_space<vmem>>, vector<2x1x32xf32>
    %59 = vector.shape_cast %58 : vector<2x1x32xf32> to vector<2x32xf32>
    %60 = vector.shape_cast %57 : vector<2x32xf32> to vector<2x1x32xf32>
    tpu.vector_store %arg9[%c0_46, %c5_47, %c0_48], %60 {strides = array<i32>} : memref<2x8x32xf32, #tpu.memory_space<vmem>>, vector<2x1x32xf32>,
    %c0_49 = arith.constant 0 : index
    %c6 = arith.constant 6 : index
    %c0_50 = arith.constant 0 : index
    %61 = vector.load %arg9[%c0_49, %c6, %c0_50] : memref<2x8x32xf32, #tpu.memory_space<vmem>>, vector<2x1x32xf32>
    %62 = vector.shape_cast %61 : vector<2x1x32xf32> to vector<2x32xf32>
    %cst_51 = arith.constant dense<0.000000e+00> : vector<2x32xf32>
    %63 = tpu.matmul %57, %11, %cst_51 {dimension_numbers = #tpu.dot_dimension_numbers<[1], [0], [0], [1], [0, 0, 1, 1], [], []>} : vector<2x32xf32>, vector<32x32xf32>, vector<2x32xf32> -> vector<2x32xf32>
    %64 = arith.addf %62, %63 : vector<2x32xf32>
    %65 = math.tanh %64 : vector<2x32xf32>
    %c0_52 = arith.constant 0 : index
    %c6_53 = arith.constant 6 : index
    %c0_54 = arith.constant 0 : index
    %66 = vector.load %arg9[%c0_52, %c6_53, %c0_54] : memref<2x8x32xf32, #tpu.memory_space<vmem>>, vector<2x1x32xf32>
    %67 = vector.shape_cast %66 : vector<2x1x32xf32> to vector<2x32xf32>
    %68 = vector.shape_cast %65 : vector<2x32xf32> to vector<2x1x32xf32>
    tpu.vector_store %arg9[%c0_52, %c6_53, %c0_54], %68 {strides = array<i32>} : memref<2x8x32xf32, #tpu.memory_space<vmem>>, vector<2x1x32xf32>,
    %c0_55 = arith.constant 0 : index
    %c7 = arith.constant 7 : index
    %c0_56 = arith.constant 0 : index
    %69 = vector.load %arg9[%c0_55, %c7, %c0_56] : memref<2x8x32xf32, #tpu.memory_space<vmem>>, vector<2x1x32xf32>
    %70 = vector.shape_cast %69 : vector<2x1x32xf32> to vector<2x32xf32>
    %cst_57 = arith.constant dense<0.000000e+00> : vector<2x32xf32>
    %71 = tpu.matmul %65, %11, %cst_57 {dimension_numbers = #tpu.dot_dimension_numbers<[1], [0], [0], [1], [0, 0, 1, 1], [], []>} : vector<2x32xf32>, vector<32x32xf32>, vector<2x32xf32> -> vector<2x32xf32>
    %72 = arith.addf %70, %71 : vector<2x32xf32>
    %73 = math.tanh %72 : vector<2x32xf32>
    %c0_58 = arith.constant 0 : index
    %c7_59 = arith.constant 7 : index
    %c0_60 = arith.constant 0 : index
    %74 = vector.load %arg9[%c0_58, %c7_59, %c0_60] : memref<2x8x32xf32, #tpu.memory_space<vmem>>, vector<2x1x32xf32>
    %75 = vector.shape_cast %74 : vector<2x1x32xf32> to vector<2x32xf32>
    %76 = vector.shape_cast %73 : vector<2x32xf32> to vector<2x1x32xf32>
    tpu.vector_store %arg9[%c0_58, %c7_59, %c0_60], %76 {strides = array<i32>} : memref<2x8x32xf32, #tpu.memory_space<vmem>>, vector<2x1x32xf32>,
    %c0_61 = arith.constant 0 : index
    %c0_62 = arith.constant 0 : index
    %77 = vector.load %arg8[%c0_61, %c0_62] : memref<2x32xf32, #tpu.memory_space<vmem>>, vector<2x32xf32>
    tpu.vector_store %arg8[%c0_61, %c0_62], %73 {strides = array<i32>} : memref<2x32xf32, #tpu.memory_space<vmem>>, vector<2x32xf32>,
    %c0_63 = arith.constant 0 : index
    %c0_64 = arith.constant 0 : index
    %c0_65 = arith.constant 0 : index
    %78 = vector.load %arg9[%c0_63, %c0_64, %c0_65] : memref<2x8x32xf32, #tpu.memory_space<vmem>>, vector<2x8x32xf32>
    %c0_66 = arith.constant 0 : index
    %c0_67 = arith.constant 0 : index
    %79 = vector.load %arg5[%c0_66, %c0_67] : memref<1x32xf32, #tpu.memory_space<vmem>>, vector<1x32xf32>
    %80 = vector.shape_cast %79 : vector<1x32xf32> to vector<1x1x32xf32>
    %81 = vector.broadcast %80 : vector<1x1x32xf32> to vector<2x8x32xf32>
    %82 = arith.mulf %78, %81 : vector<2x8x32xf32>
    %cst_68 = arith.constant dense<0.000000e+00> : vector<2x8xf32>
    %83 = vector.multi_reduction <add>, %82, %cst_68 [2] : vector<2x8x32xf32> to vector<2x8xf32>
    %c0_69 = arith.constant 0 : index
    %c0_70 = arith.constant 0 : index
    %84 = memref.load %arg6[%c0_69, %c0_70] : memref<1x1xf32, #tpu.memory_space<smem>>
    %85 = vector.broadcast %84 : f32 to vector<2x8xf32>
    %86 = arith.addf %83, %85 : vector<2x8xf32>
    %c0_71 = arith.constant 0 : index
    %c0_72 = arith.constant 0 : index
    %87 = vector.load %arg7[%c0_71, %c0_72] : memref<2x8xf32, #tpu.memory_space<vmem>>, vector<2x8xf32>
    tpu.vector_store %arg7[%c0_71, %c0_72], %86 {strides = array<i32>} : memref<2x8xf32, #tpu.memory_space<vmem>>, vector<2x8xf32>,
    return
  }
}

</mosaic_0001>

<llo_original>
// kernel: tpu_custom_call.1
$region0: #{tpu_custom_call.1}
  #allocation0 [shape = 'u32[]', space=smem, size = 0x4, offset = 0x4, fixed_abs, tag = 'smem constant byte address 0x4 - core index']
  #allocation1 [shape = 'u32[144,128]{1,0:T(1,128)}', space=vmem, size = 0x12000, scoped, tag = 'internal scratch']
  #allocation2 [shape = 'f32[2,8,32]{2,1,0:T(8,128)}', space=vmem, size = 0x2000, scoped, tag = 'scratch operand']
  #allocation3 [shape = 'f32[1,1]{1,0:T(1,128)S(6)}', space=smem, size = 0x200, scoped, tag = 'scoped memory for tpu_custom_call.1']
  %s0 = inlined_call_operand.vmem [shape: f32[2,8,1], index: 0, kind: input, shape index: {}]
  %s1 = inlined_call_operand.hbm [shape: f32[2,32], index: 1, kind: input, shape index: {}]
  %s2 = inlined_call_operand.vmem [shape: f32[1,32], index: 2, kind: input, shape index: {}]
  %s3 = inlined_call_operand.vmem [shape: f32[32,32], index: 3, kind: input, shape index: {}]
  %s4 = inlined_call_operand.vmem [shape: f32[1,32], index: 4, kind: input, shape index: {}]
  %s5 = inlined_call_operand.vmem [shape: f32[1,32], index: 5, kind: input, shape index: {}]
  %s6 = inlined_call_operand.<no memory space> [shape: f32[1,1], index: 6, kind: input, shape index: {}]
  %s7 = inlined_call_operand.hbm [shape: f32[2,8], index: 7, kind: output, shape index: {0}]
  %s8 = inlined_call_operand.hbm [shape: f32[2,32], index: 8, kind: output, shape index: {1}]
  %9 = xla_tuple %s7, %s8
  %s10 = sld [smem:[#allocation0]]
  $region50: #{tpu_custom_call.1} parent=0
    _
  %s12 = ssub.s32 1, %s10
  %s13 = scalar_select 0, %s12, %s10
  %14 = sst [smem:[#allocation3]] %s6
  $region1: #{tpu_custom_call.1} parent=0
    #allocation4 [shape = 'u8[1024]{0}', space=vmem, size = 0x400, scoped, tag = 'input window, operand 1, single buffered']
    #allocation5 [shape = 's32[1]{0}', space=sflag, size = 0x4, scoped, tag = 'scoped memory for tpu_custom_call.1']
    #allocation6 [shape = 's32[1]{0}', space=sflag, size = 0x4, scoped, tag = 'scoped memory for tpu_custom_call.1']
    #allocation7 [shape = 'u8[1024]{0}', space=vmem, size = 0x400, scoped, tag = 'output window, operand 0, single buffered']
    #allocation8 [shape = 'u8[1024]{0}', space=vmem, size = 0x400, scoped, tag = 'output window, operand 1, single buffered']
    #allocation9 [shape = 's32[1]{0}', space=sflag, size = 0x4, scoped, tag = 'scoped memory for tpu_custom_call.1']
    %15 = vsyncpa [#allocation5], 0
    %16 = vsyncpa [#allocation6], 0
    %17 = vsyncpa [#allocation9], 0
    // Predicated region
    $region2: #{tpu_custom_call.1} parent=1 // pred_check
      _
    $region3: #{tpu_custom_call.1} parent=1 // pred_check_branch
      %19 = sbr.rel (0) target = $region5
    $region4: #{tpu_custom_call.1} parent=1 // pred_region
      _
    $region5: #{tpu_custom_call.1} parent=1 // pred_fallthru
      _
    // Predicated region
    $region6: #{tpu_custom_call.1} parent=1 // pred_check
      _
    $region7: #{tpu_custom_call.1} parent=1 // pred_check_branch
      %21 = sbr.rel (0) target = $region9
    $region8: #{tpu_custom_call.1} parent=1 // pred_region
      %s23 = ssub.s32 32, 32
      %24 = vsyncadd [#allocation5], %s23
      %s26 = sshll.u32 [#allocation4], 4
      %s27 = int_to_ptr.vmem [resolvable:$true] %s26
      %29 = dma.hbm_to_vmem [thread:$0]  %s1, 32, %s27, [#allocation5]
    $region9: #{tpu_custom_call.1} parent=1 // pred_fallthru
      _
    // Predicated region
    $region10: #{tpu_custom_call.1} parent=1 // pred_check
      _
    $region11: #{tpu_custom_call.1} parent=1 // pred_check_branch
      %31 = sbr.rel (0) target = $region13
    $region12: #{tpu_custom_call.1} parent=1 // pred_region
      _
    $region13: #{tpu_custom_call.1} parent=1 // pred_fallthru
      _
    // Predicated region
    $region14: #{tpu_custom_call.1} parent=1 // pred_check
      _
    $region15: #{tpu_custom_call.1} parent=1 // pred_check_branch
      %33 = sbr.rel (0) target = $region17
    $region16: #{tpu_custom_call.1} parent=1 // pred_region
      _
    $region17: #{tpu_custom_call.1} parent=1 // pred_fallthru
      _
    // Predicated region
    $region18: #{tpu_custom_call.1} parent=1 // pred_check
      _
    $region19: #{tpu_custom_call.1} parent=1 // pred_check_branch
      %35 = sbr.rel (0) target = $region21
    $region20: #{tpu_custom_call.1} parent=1 // pred_region
      _
    $region21: #{tpu_custom_call.1} parent=1 // pred_fallthru
      _
    // Predicated region
    $region22: #{tpu_custom_call.1} parent=1 // pred_check
      _
    $region23: #{tpu_custom_call.1} parent=1 // pred_check_branch
      %37 = sbr.rel (0) target = $region25
    $region24: #{tpu_custom_call.1} parent=1 // pred_region
      _
    $region25: #{tpu_custom_call.1} parent=1 // pred_fallthru
      _
    // Predicated region
    $region26: #{tpu_custom_call.1} parent=1 // pred_check
      _
    $region27: #{tpu_custom_call.1} parent=1 // pred_check_branch
      %39 = sbr.rel (0) target = $region29
    $region28: #{tpu_custom_call.1} parent=1 // pred_region
      _
    $region29: #{tpu_custom_call.1} parent=1 // pred_fallthru
      _
    // Predicated region
    $region30: #{tpu_custom_call.1} parent=1 // pred_check
      _
    $region31: #{tpu_custom_call.1} parent=1 // pred_check_branch
      %41 = sbr.rel (0) target = $region33
    $region32: #{tpu_custom_call.1} parent=1 // pred_region
      %42 = dma.done [#allocation5], 32
    $region33: #{tpu_custom_call.1} parent=1 // pred_fallthru
      _
    %v43 = vld [vmem:[%s0] sm:$0xff]
    %v44 = vld [vmem:[%s0 + $0x8] sm:$0xff]
    %v45 = vld [vmem:[%s2] sm:$0x1]
    %47 = vset.pattern.permute.xlu0 0
    %48 = vperm.xlu0 %47, %v43
    %v49 = vpop.permute.xlu0 %48
    %52 = vset.pattern.permute.xlu0 0
    %53 = vperm.xlu0 %52, %v44
    %v54 = vpop.permute.xlu0 %53
    %v57 = vlaneseq
    %v58 = vshrl.u32 %v57, 7
    %v59 = vsub.s32 0, %v58
    %v60 = vrot.slane %v45, %v59
    %v62 = vmul.f32 %v49, %v60
    %v63 = vmul.f32 %v54, %v60
    %v64 = vld [vmem:[%s4] sm:$0x1]
    %v66 = vlaneseq
    %v67 = vshrl.u32 %v66, 7
    %v68 = vsub.s32 0, %v67
    %v69 = vrot.slane %v64, %v68
    %v71 = vadd.f32 %v62, %v69
    %v72 = vadd.f32 %v63, %v69
    %vm73 = vcmask 261120
    %74 = vst.msk [vmem:[#allocation2] sm:$0xff] %vm73, %v71
    %75 = vst.msk [vmem:[#allocation2 + $0x8] sm:$0xff] %vm73, %v72
    %v76 = vld [vmem:[%s3] sm:$0xff]
    %v77 = vld [vmem:[%s3 + $0x8] sm:$0xff]
    %v78 = vld [vmem:[%s3 + $0x10] sm:$0xff]
    %v79 = vld [vmem:[%s3 + $0x18] sm:$0xff]
    %v80 = vld [vmem:[#allocation4] sm:$0x3]
    %v81 = vld [vmem:[#allocation2] sm:$0x1]
    %v82 = vld [vmem:[#allocation2 + $0x8] sm:$0x1]
    %v84 = vsel %vm73, %v80, 0
    %86 = vmatprep.subr.mxu0 0.0
    %87 = vmatpush1.msra.mxu0 %v76
    %88 = vmatprep.subr.mxu0 0.0
    %89 = vmatpush1.msra.mxu0 %v77
    %90 = vmatprep.subr.mxu0 0.0
    %91 = vmatpush1.msra.mxu0 %v78
    %92 = vmatprep.subr.mxu0 0.0
    %93 = vmatpush1.msra.mxu0 %v79
    %94 = vmatprep.subr.mxu0 0.0
    %95 = vmatpush1.msra.mxu0 0.0
    %96 = vmatprep.subr.mxu0 0.0
    %97 = vmatpush1.msra.mxu0 0.0
    %98 = vmatprep.subr.mxu0 0.0
    %99 = vmatpush1.msra.mxu0 0.0
    %100 = vmatprep.subr.mxu0 0.0
    %101 = vmatpush1.msra.mxu0 0.0
    %102 = vmatprep.subr.mxu0 0.0
    %103 = vmatpush1.msra.mxu0 0.0
    %104 = vmatprep.subr.mxu0 0.0
    %105 = vmatpush1.msra.mxu0 0.0
    %106 = vmatprep.subr.mxu0 0.0
    %107 = vmatpush1.msra.mxu0 0.0
    %108 = vmatprep.subr.mxu0 0.0
    %109 = vmatpush1.msra.mxu0 0.0
    %110 = vmatprep.subr.mxu0 0.0
    %111 = vmatpush1.msra.mxu0 0.0
    %112 = vmatprep.subr.mxu0 0.0
    %113 = vmatpush1.msra.mxu0 0.0
    %114 = vmatprep.subr.mxu0 0.0
    %115 = vmatpush1.msra.mxu0 0.0
    %116 = vmatprep.subr.mxu0 0.0
    %117 = vmatpush1.msra.mxu0 0.0
    %118 = vmatprep.subr.mxu0 0.0
    %119 = vmatpush1.msra.mxu0 0.0
    %120 = vmatprep.subr.mxu0 0.0
    %121 = vmatpush1.msra.mxu0 0.0
    %122 = vmatprep.subr.mxu0 0.0
    %123 = vmatpush1.msra.mxu0 0.0
    %124 = vmatprep.subr.mxu0 0.0
    %125 = vmatpush1.msra.mxu0 0.0
    %126 = vmatprep.subr.mxu0 0.0
    %127 = vmatpush1.msra.mxu0 0.0
    %128 = vmatprep.subr.mxu0 0.0
    %129 = vmatpush1.msra.mxu0 0.0
    %130 = vmatprep.subr.mxu0 0.0
    %131 = vmatpush1.msra.mxu0 0.0
    %132 = vmatprep.subr.mxu0 0.0
    %133 = vmatpush1.msra.mxu0 0.0
    %134 = vmatprep.subr.mxu0 0.0
    %135 = vmatpush1.msra.mxu0 0.0
    %136 = vmatprep.subr.mxu0 0.0
    %137 = vmatpush1.msra.mxu0 0.0
    %138 = vmatprep.subr.mxu0 0.0
    %139 = vmatpush1.msra.mxu0 0.0
    %140 = vmatprep.subr.mxu0 0.0
    %141 = vmatpush1.msra.mxu0 0.0
    %142 = vmatprep.subr.mxu0 0.0
    %143 = vmatpush1.msra.mxu0 0.0
    %144 = vmatprep.subr.mxu0 0.0
    %145 = vmatpush1.msra.mxu0 0.0
    %146 = vmatprep.subr.mxu0 0.0
    %147 = vmatpush1.msra.mxu0 0.0
    %148 = vmatprep.subr.mxu0 0.0
    %149 = vmatpush1.msra.mxu0 0.0
    %150 = vmatprep.mubr.f32.mxu0 0.0
    %151 = vmatmul.mubr.f32.gmra.mrb[0].mxu0 %v84
    %v152 = vpop.f32.mrb[0].mxu0
    %v153 = vadd.f32 0.0, %v152
    %v154 = vpop.f32.mrb[0].mxu0
    %155 = vdwg.mxu0
    %v157 = vrot.slane %v153, 1
    %v160 = vadd.f32 %v81, %v153
    %v161 = vadd.f32 %v82, %v157
    %v162 = vtanh.pop %v160
    %v163 = vtanh.pop %v161
    %vm164 = vcmask 253952
    %165 = vst.msk [vmem:[#allocation2] sm:$0x1] %vm164, %v162
    %166 = vst.msk [vmem:[#allocation2 + $0x8] sm:$0x1] %vm164, %v163
    %v167 = vld [vmem:[#allocation2 + $0x1] sm:$0x1]
    %v168 = vld [vmem:[#allocation2 + $0x9] sm:$0x1]
    %v171 = vrot.slane %v163, 7
    %vm172 = vcmask 1041409
    %v173 = vsel %vm172, %v171, %v162
    %v174 = vsel %vm73, %v173, 0
    %176 = vmatprep.subr.mxu0 0.0
    %177 = vmatpush1.msra.mxu0 %v76
    %178 = vmatprep.subr.mxu0 0.0
    %179 = vmatpush1.msra.mxu0 %v77
    %180 = vmatprep.subr.mxu0 0.0
    %181 = vmatpush1.msra.mxu0 %v78
    %182 = vmatprep.subr.mxu0 0.0
    %183 = vmatpush1.msra.mxu0 %v79
    %184 = vmatprep.subr.mxu0 0.0
    %185 = vmatpush1.msra.mxu0 0.0
    %186 = vmatprep.subr.mxu0 0.0
    %187 = vmatpush1.msra.mxu0 0.0
    %188 = vmatprep.subr.mxu0 0.0
    %189 = vmatpush1.msra.mxu0 0.0
    %190 = vmatprep.subr.mxu0 0.0
    %191 = vmatpush1.msra.mxu0 0.0
    %192 = vmatprep.subr.mxu0 0.0
    %193 = vmatpush1.msra.mxu0 0.0
    %194 = vmatprep.subr.mxu0 0.0
    %195 = vmatpush1.msra.mxu0 0.0
    %196 = vmatprep.subr.mxu0 0.0
    %197 = vmatpush1.msra.mxu0 0.0
    %198 = vmatprep.subr.mxu0 0.0
    %199 = vmatpush1.msra.mxu0 0.0
    %200 = vmatprep.subr.mxu0 0.0
    %201 = vmatpush1.msra.mxu0 0.0
    %202 = vmatprep.subr.mxu0 0.0
    %203 = vmatpush1.msra.mxu0 0.0
    %204 = vmatprep.subr.mxu0 0.0
    %205 = vmatpush1.msra.mxu0 0.0
    %206 = vmatprep.subr.mxu0 0.0
    %207 = vmatpush1.msra.mxu0 0.0
    %208 = vmatprep.subr.mxu0 0.0
    %209 = vmatpush1.msra.mxu0 0.0
    %210 = vmatprep.subr.mxu0 0.0
    %211 = vmatpush1.msra.mxu0 0.0
    %212 = vmatprep.subr.mxu0 0.0
    %213 = vmatpush1.msra.mxu0 0.0
    %214 = vmatprep.subr.mxu0 0.0
    %215 = vmatpush1.msra.mxu0 0.0
    %216 = vmatprep.subr.mxu0 0.0
    %217 = vmatpush1.msra.mxu0 0.0
    %218 = vmatprep.subr.mxu0 0.0
    %219 = vmatpush1.msra.mxu0 0.0
    %220 = vmatprep.subr.mxu0 0.0
    %221 = vmatpush1.msra.mxu0 0.0
    %222 = vmatprep.subr.mxu0 0.0
    %223 = vmatpush1.msra.mxu0 0.0
    %224 = vmatprep.subr.mxu0 0.0
    %225 = vmatpush1.msra.mxu0 0.0
    %226 = vmatprep.subr.mxu0 0.0
    %227 = vmatpush1.msra.mxu0 0.0
    %228 = vmatprep.subr.mxu0 0.0
    %229 = vmatpush1.msra.mxu0 0.0
    %230 = vmatprep.subr.mxu0 0.0
    %231 = vmatpush1.msra.mxu0 0.0
    %232 = vmatprep.subr.mxu0 0.0
    %233 = vmatpush1.msra.mxu0 0.0
    %234 = vmatprep.subr.mxu0 0.0
    %235 = vmatpush1.msra.mxu0 0.0
    %236 = vmatprep.subr.mxu0 0.0
    %237 = vmatpush1.msra.mxu0 0.0
    %238 = vmatprep.subr.mxu0 0.0
    %239 = vmatpush1.msra.mxu0 0.0
    %240 = vmatprep.mubr.f32.mxu0 0.0
    %241 = vmatmul.mubr.f32.gmra.mrb[0].mxu0 %v174
    %v242 = vpop.f32.mrb[0].mxu0
    %v243 = vadd.f32 0.0, %v242
    %v244 = vpop.f32.mrb[0].mxu0
    %245 = vdwg.mxu0
    %v247 = vrot.slane %v243, 1
    %v250 = vadd.f32 %v167, %v243
    %v251 = vadd.f32 %v168, %v247
    %v252 = vtanh.pop %v250
    %v253 = vtanh.pop %v251
    %254 = vst.msk [vmem:[#allocation2 + $0x1] sm:$0x1] %vm164, %v252
    %255 = vst.msk [vmem:[#allocation2 + $0x9] sm:$0x1] %vm164, %v253
    %v256 = vld [vmem:[#allocation2 + $0x2] sm:$0x1]
    %v257 = vld [vmem:[#allocation2 + $0xa] sm:$0x1]
    %v260 = vrot.slane %v253, 7
    %v261 = vsel %vm172, %v260, %v252
    %v262 = vsel %vm73, %v261, 0
    %264 = vmatprep.subr.mxu0 0.0
    %265 = vmatpush1.msra.mxu0 %v76
    %266 = vmatprep.subr.mxu0 0.0
    %267 = vmatpush1.msra.mxu0 %v77
    %268 = vmatprep.subr.mxu0 0.0
    %269 = vmatpush1.msra.mxu0 %v78
    %270 = vmatprep.subr.mxu0 0.0
    %271 = vmatpush1.msra.mxu0 %v79
    %272 = vmatprep.subr.mxu0 0.0
    %273 = vmatpush1.msra.mxu0 0.0
    %274 = vmatprep.subr.mxu0 0.0
    %275 = vmatpush1.msra.mxu0 0.0
    %276 = vmatprep.subr.mxu0 0.0
    %277 = vmatpush1.msra.mxu0 0.0
    %278 = vmatprep.subr.mxu0 0.0
    %279 = vmatpush1.msra.mxu0 0.0
    %280 = vmatprep.subr.mxu0 0.0
    %281 = vmatpush1.msra.mxu0 0.0
    %282 = vmatprep.subr.mxu0 0.0
    %283 = vmatpush1.msra.mxu0 0.0
    %284 = vmatprep.subr.mxu0 0.0
    %285 = vmatpush1.msra.mxu0 0.0
    %286 = vmatprep.subr.mxu0 0.0
    %287 = vmatpush1.msra.mxu0 0.0
    %288 = vmatprep.subr.mxu0 0.0
    %289 = vmatpush1.msra.mxu0 0.0
    %290 = vmatprep.subr.mxu0 0.0
    %291 = vmatpush1.msra.mxu0 0.0
    %292 = vmatprep.subr.mxu0 0.0
    %293 = vmatpush1.msra.mxu0 0.0
    %294 = vmatprep.subr.mxu0 0.0
    %295 = vmatpush1.msra.mxu0 0.0
    %296 = vmatprep.subr.mxu0 0.0
    %297 = vmatpush1.msra.mxu0 0.0
    %298 = vmatprep.subr.mxu0 0.0
    %299 = vmatpush1.msra.mxu0 0.0
    %300 = vmatprep.subr.mxu0 0.0
    %301 = vmatpush1.msra.mxu0 0.0
    %302 = vmatprep.subr.mxu0 0.0
    %303 = vmatpush1.msra.mxu0 0.0
    %304 = vmatprep.subr.mxu0 0.0
    %305 = vmatpush1.msra.mxu0 0.0
    %306 = vmatprep.subr.mxu0 0.0
    %307 = vmatpush1.msra.mxu0 0.0
    %308 = vmatprep.subr.mxu0 0.0
    %309 = vmatpush1.msra.mxu0 0.0
    %310 = vmatprep.subr.mxu0 0.0
    %311 = vmatpush1.msra.mxu0 0.0
    %312 = vmatprep.subr.mxu0 0.0
    %313 = vmatpush1.msra.mxu0 0.0
    %314 = vmatprep.subr.mxu0 0.0
    %315 = vmatpush1.msra.mxu0 0.0
    %316 = vmatprep.subr.mxu0 0.0
    %317 = vmatpush1.msra.mxu0 0.0
    %318 = vmatprep.subr.mxu0 0.0
    %319 = vmatpush1.msra.mxu0 0.0
    %320 = vmatprep.subr.mxu0 0.0
    %321 = vmatpush1.msra.mxu0 0.0
    %322 = vmatprep.subr.mxu0 0.0
    %323 = vmatpush1.msra.mxu0 0.0
    %324 = vmatprep.subr.mxu0 0.0
    %325 = vmatpush1.msra.mxu0 0.0
    %326 = vmatprep.subr.mxu0 0.0
    %327 = vmatpush1.msra.mxu0 0.0
    %328 = vmatprep.mubr.f32.mxu0 0.0
    %329 = vmatmul.mubr.f32.gmra.mrb[0].mxu0 %v262
    %v330 = vpop.f32.mrb[0].mxu0
    %v331 = vadd.f32 0.0, %v330
    %v332 = vpop.f32.mrb[0].mxu0
    %333 = vdwg.mxu0
    %v335 = vrot.slane %v331, 1
    %v338 = vadd.f32 %v256, %v331
    %v339 = vadd.f32 %v257, %v335
    %v340 = vtanh.pop %v338
    %v341 = vtanh.pop %v339
    %342 = vst.msk [vmem:[#allocation2 + $0x2] sm:$0x1] %vm164, %v340
    %343 = vst.msk [vmem:[#allocation2 + $0xa] sm:$0x1] %vm164, %v341
    %v344 = vld [vmem:[#allocation2 + $0x3] sm:$0x1]
    %v345 = vld [vmem:[#allocation2 + $0xb] sm:$0x1]
    %v348 = vrot.slane %v341, 7
    %v349 = vsel %vm172, %v348, %v340
    %v350 = vsel %vm73, %v349, 0
    %352 = vmatprep.subr.mxu0 0.0
    %353 = vmatpush1.msra.mxu0 %v76
    %354 = vmatprep.subr.mxu0 0.0
    %355 = vmatpush1.msra.mxu0 %v77
    %356 = vmatprep.subr.mxu0 0.0
    %357 = vmatpush1.msra.mxu0 %v78
    %358 = vmatprep.subr.mxu0 0.0
    %359 = vmatpush1.msra.mxu0 %v79
    %360 = vmatprep.subr.mxu0 0.0
    %361 = vmatpush1.msra.mxu0 0.0
    %362 = vmatprep.subr.mxu0 0.0
    %363 = vmatpush1.msra.mxu0 0.0
    %364 = vmatprep.subr.mxu0 0.0
    %365 = vmatpush1.msra.mxu0 0.0
    %366 = vmatprep.subr.mxu0 0.0
    %367 = vmatpush1.msra.mxu0 0.0
    %368 = vmatprep.subr.mxu0 0.0
    %369 = vmatpush1.msra.mxu0 0.0
    %370 = vmatprep.subr.mxu0 0.0
    %371 = vmatpush1.msra.mxu0 0.0
    %372 = vmatprep.subr.mxu0 0.0
    %373 = vmatpush1.msra.mxu0 0.0
    %374 = vmatprep.subr.mxu0 0.0
    %375 = vmatpush1.msra.mxu0 0.0
    %376 = vmatprep.subr.mxu0 0.0
    %377 = vmatpush1.msra.mxu0 0.0
    %378 = vmatprep.subr.mxu0 0.0
    %379 = vmatpush1.msra.mxu0 0.0
    %380 = vmatprep.subr.mxu0 0.0
    %381 = vmatpush1.msra.mxu0 0.0
    %382 = vmatprep.subr.mxu0 0.0
    %383 = vmatpush1.msra.mxu0 0.0
    %384 = vmatprep.subr.mxu0 0.0
    %385 = vmatpush1.msra.mxu0 0.0
    %386 = vmatprep.subr.mxu0 0.0
    %387 = vmatpush1.msra.mxu0 0.0
    %388 = vmatprep.subr.mxu0 0.0
    %389 = vmatpush1.msra.mxu0 0.0
    %390 = vmatprep.subr.mxu0 0.0
    %391 = vmatpush1.msra.mxu0 0.0
    %392 = vmatprep.subr.mxu0 0.0
    %393 = vmatpush1.msra.mxu0 0.0
    %394 = vmatprep.subr.mxu0 0.0
    %395 = vmatpush1.msra.mxu0 0.0
    %396 = vmatprep.subr.mxu0 0.0
    %397 = vmatpush1.msra.mxu0 0.0
    %398 = vmatprep.subr.mxu0 0.0
    %399 = vmatpush1.msra.mxu0 0.0
    %400 = vmatprep.subr.mxu0 0.0
    %401 = vmatpush1.msra.mxu0 0.0
    %402 = vmatprep.subr.mxu0 0.0
    %403 = vmatpush1.msra.mxu0 0.0
    %404 = vmatprep.subr.mxu0 0.0
    %405 = vmatpush1.msra.mxu0 0.0
    %406 = vmatprep.subr.mxu0 0.0
    %407 = vmatpush1.msra.mxu0 0.0
    %408 = vmatprep.subr.mxu0 0.0
    %409 = vmatpush1.msra.mxu0 0.0
    %410 = vmatprep.subr.mxu0 0.0
    %411 = vmatpush1.msra.mxu0 0.0
    %412 = vmatprep.subr.mxu0 0.0
    %413 = vmatpush1.msra.mxu0 0.0
    %414 = vmatprep.subr.mxu0 0.0
    %415 = vmatpush1.msra.mxu0 0.0
    %416 = vmatprep.mubr.f32.mxu0 0.0
    %417 = vmatmul.mubr.f32.gmra.mrb[0].mxu0 %v350
    %v418 = vpop.f32.mrb[0].mxu0
    %v419 = vadd.f32 0.0, %v418
    %v420 = vpop.f32.mrb[0].mxu0
    %421 = vdwg.mxu0
    %v423 = vrot.slane %v419, 1
    %v426 = vadd.f32 %v344, %v419
    %v427 = vadd.f32 %v345, %v423
    %v428 = vtanh.pop %v426
    %v429 = vtanh.pop %v427
    %430 = vst.msk [vmem:[#allocation2 + $0x3] sm:$0x1] %vm164, %v428
    %431 = vst.msk [vmem:[#allocation2 + $0xb] sm:$0x1] %vm164, %v429
    %v432 = vld [vmem:[#allocation2 + $0x4] sm:$0x1]
    %v433 = vld [vmem:[#allocation2 + $0xc] sm:$0x1]
    %v436 = vrot.slane %v429, 7
    %v437 = vsel %vm172, %v436, %v428
    %v438 = vsel %vm73, %v437, 0
    %440 = vmatprep.subr.mxu0 0.0
    %441 = vmatpush1.msra.mxu0 %v76
    %442 = vmatprep.subr.mxu0 0.0
    %443 = vmatpush1.msra.mxu0 %v77
    %444 = vmatprep.subr.mxu0 0.0
    %445 = vmatpush1.msra.mxu0 %v78
    %446 = vmatprep.subr.mxu0 0.0
    %447 = vmatpush1.msra.mxu0 %v79
    %448 = vmatprep.subr.mxu0 0.0
    %449 = vmatpush1.msra.mxu0 0.0
    %450 = vmatprep.subr.mxu0 0.0
    %451 = vmatpush1.msra.mxu0 0.0
    %452 = vmatprep.subr.mxu0 0.0
    %453 = vmatpush1.msra.mxu0 0.0
    %454 = vmatprep.subr.mxu0 0.0
    %455 = vmatpush1.msra.mxu0 0.0
    %456 = vmatprep.subr.mxu0 0.0
    %457 = vmatpush1.msra.mxu0 0.0
    %458 = vmatprep.subr.mxu0 0.0
    %459 = vmatpush1.msra.mxu0 0.0
    %460 = vmatprep.subr.mxu0 0.0
    %461 = vmatpush1.msra.mxu0 0.0
    %462 = vmatprep.subr.mxu0 0.0
    %463 = vmatpush1.msra.mxu0 0.0
    %464 = vmatprep.subr.mxu0 0.0
    %465 = vmatpush1.msra.mxu0 0.0
    %466 = vmatprep.subr.mxu0 0.0
    %467 = vmatpush1.msra.mxu0 0.0
    %468 = vmatprep.subr.mxu0 0.0
    %469 = vmatpush1.msra.mxu0 0.0
    %470 = vmatprep.subr.mxu0 0.0
    %471 = vmatpush1.msra.mxu0 0.0
    %472 = vmatprep.subr.mxu0 0.0
    %473 = vmatpush1.msra.mxu0 0.0
    %474 = vmatprep.subr.mxu0 0.0
    %475 = vmatpush1.msra.mxu0 0.0
    %476 = vmatprep.subr.mxu0 0.0
    %477 = vmatpush1.msra.mxu0 0.0
    %478 = vmatprep.subr.mxu0 0.0
    %479 = vmatpush1.msra.mxu0 0.0
    %480 = vmatprep.subr.mxu0 0.0
    %481 = vmatpush1.msra.mxu0 0.0
    %482 = vmatprep.subr.mxu0 0.0
    %483 = vmatpush1.msra.mxu0 0.0
    %484 = vmatprep.subr.mxu0 0.0
    %485 = vmatpush1.msra.mxu0 0.0
    %486 = vmatprep.subr.mxu0 0.0
    %487 = vmatpush1.msra.mxu0 0.0
    %488 = vmatprep.subr.mxu0 0.0
    %489 = vmatpush1.msra.mxu0 0.0
    %490 = vmatprep.subr.mxu0 0.0
    %491 = vmatpush1.msra.mxu0 0.0
    %492 = vmatprep.subr.mxu0 0.0
    %493 = vmatpush1.msra.mxu0 0.0
    %494 = vmatprep.subr.mxu0 0.0
    %495 = vmatpush1.msra.mxu0 0.0
    %496 = vmatprep.subr.mxu0 0.0
    %497 = vmatpush1.msra.mxu0 0.0
    %498 = vmatprep.subr.mxu0 0.0
    %499 = vmatpush1.msra.mxu0 0.0
    %500 = vmatprep.subr.mxu0 0.0
    %501 = vmatpush1.msra.mxu0 0.0
    %502 = vmatprep.subr.mxu0 0.0
    %503 = vmatpush1.msra.mxu0 0.0
    %504 = vmatprep.mubr.f32.mxu0 0.0
    %505 = vmatmul.mubr.f32.gmra.mrb[0].mxu0 %v438
    %v506 = vpop.f32.mrb[0].mxu0
    %v507 = vadd.f32 0.0, %v506
    %v508 = vpop.f32.mrb[0].mxu0
    %509 = vdwg.mxu0
    %v511 = vrot.slane %v507, 1
    %v514 = vadd.f32 %v432, %v507
    %v515 = vadd.f32 %v433, %v511
    %v516 = vtanh.pop %v514
    %v517 = vtanh.pop %v515
    %518 = vst.msk [vmem:[#allocation2 + $0x4] sm:$0x1] %vm164, %v516
    %519 = vst.msk [vmem:[#allocation2 + $0xc] sm:$0x1] %vm164, %v517
    %v520 = vld [vmem:[#allocation2 + $0x5] sm:$0x1]
    %v521 = vld [vmem:[#allocation2 + $0xd] sm:$0x1]
    %v524 = vrot.slane %v517, 7
    %v525 = vsel %vm172, %v524, %v516
    %v526 = vsel %vm73, %v525, 0
    %528 = vmatprep.subr.mxu0 0.0
    %529 = vmatpush1.msra.mxu0 %v76
    %530 = vmatprep.subr.mxu0 0.0
    %531 = vmatpush1.msra.mxu0 %v77
    %532 = vmatprep.subr.mxu0 0.0
    %533 = vmatpush1.msra.mxu0 %v78
    %534 = vmatprep.subr.mxu0 0.0
    %535 = vmatpush1.msra.mxu0 %v79
    %536 = vmatprep.subr.mxu0 0.0
    %537 = vmatpush1.msra.mxu0 0.0
    %538 = vmatprep.subr.mxu0 0.0
    %539 = vmatpush1.msra.mxu0 0.0
    %540 = vmatprep.subr.mxu0 0.0
    %541 = vmatpush1.msra.mxu0 0.0
    %542 = vmatprep.subr.mxu0 0.0
    %543 = vmatpush1.msra.mxu0 0.0
    %544 = vmatprep.subr.mxu0 0.0
    %545 = vmatpush1.msra.mxu0 0.0
    %546 = vmatprep.subr.mxu0 0.0
    %547 = vmatpush1.msra.mxu0 0.0
    %548 = vmatprep.subr.mxu0 0.0
    %549 = vmatpush1.msra.mxu0 0.0
    %550 = vmatprep.subr.mxu0 0.0
    %551 = vmatpush1.msra.mxu0 0.0
    %552 = vmatprep.subr.mxu0 0.0
    %553 = vmatpush1.msra.mxu0 0.0
    %554 = vmatprep.subr.mxu0 0.0
    %555 = vmatpush1.msra.mxu0 0.0
    %556 = vmatprep.subr.mxu0 0.0
    %557 = vmatpush1.msra.mxu0 0.0
    %558 = vmatprep.subr.mxu0 0.0
    %559 = vmatpush1.msra.mxu0 0.0
    %560 = vmatprep.subr.mxu0 0.0
    %561 = vmatpush1.msra.mxu0 0.0
    %562 = vmatprep.subr.mxu0 0.0
    %563 = vmatpush1.msra.mxu0 0.0
    %564 = vmatprep.subr.mxu0 0.0
    %565 = vmatpush1.msra.mxu0 0.0
    %566 = vmatprep.subr.mxu0 0.0
    %567 = vmatpush1.msra.mxu0 0.0
    %568 = vmatprep.subr.mxu0 0.0
    %569 = vmatpush1.msra.mxu0 0.0
    %570 = vmatprep.subr.mxu0 0.0
    %571 = vmatpush1.msra.mxu0 0.0
    %572 = vmatprep.subr.mxu0 0.0
    %573 = vmatpush1.msra.mxu0 0.0
    %574 = vmatprep.subr.mxu0 0.0
    %575 = vmatpush1.msra.mxu0 0.0
    %576 = vmatprep.subr.mxu0 0.0
    %577 = vmatpush1.msra.mxu0 0.0
    %578 = vmatprep.subr.mxu0 0.0
    %579 = vmatpush1.msra.mxu0 0.0
    %580 = vmatprep.subr.mxu0 0.0
    %581 = vmatpush1.msra.mxu0 0.0
    %582 = vmatprep.subr.mxu0 0.0
    %583 = vmatpush1.msra.mxu0 0.0
    %584 = vmatprep.subr.mxu0 0.0
    %585 = vmatpush1.msra.mxu0 0.0
    %586 = vmatprep.subr.mxu0 0.0
    %587 = vmatpush1.msra.mxu0 0.0
    %588 = vmatprep.subr.mxu0 0.0
    %589 = vmatpush1.msra.mxu0 0.0
    %590 = vmatprep.subr.mxu0 0.0
    %591 = vmatpush1.msra.mxu0 0.0
    %592 = vmatprep.mubr.f32.mxu0 0.0
    %593 = vmatmul.mubr.f32.gmra.mrb[0].mxu0 %v526
    %v594 = vpop.f32.mrb[0].mxu0
    %v595 = vadd.f32 0.0, %v594
    %v596 = vpop.f32.mrb[0].mxu0
    %597 = vdwg.mxu0
    %v599 = vrot.slane %v595, 1
    %v602 = vadd.f32 %v520, %v595
    %v603 = vadd.f32 %v521, %v599
    %v604 = vtanh.pop %v602
    %v605 = vtanh.pop %v603
    %606 = vst.msk [vmem:[#allocation2 + $0x5] sm:$0x1] %vm164, %v604
    %607 = vst.msk [vmem:[#allocation2 + $0xd] sm:$0x1] %vm164, %v605
    %v608 = vld [vmem:[#allocation2 + $0x6] sm:$0x1]
    %v609 = vld [vmem:[#allocation2 + $0xe] sm:$0x1]
    %v612 = vrot.slane %v605, 7
    %v613 = vsel %vm172, %v612, %v604
    %v614 = vsel %vm73, %v613, 0
    %616 = vmatprep.subr.mxu0 0.0
    %617 = vmatpush1.msra.mxu0 %v76
    %618 = vmatprep.subr.mxu0 0.0
    %619 = vmatpush1.msra.mxu0 %v77
    %620 = vmatprep.subr.mxu0 0.0
    %621 = vmatpush1.msra.mxu0 %v78
    %622 = vmatprep.subr.mxu0 0.0
    %623 = vmatpush1.msra.mxu0 %v79
    %624 = vmatprep.subr.mxu0 0.0
    %625 = vmatpush1.msra.mxu0 0.0
    %626 = vmatprep.subr.mxu0 0.0
    %627 = vmatpush1.msra.mxu0 0.0
    %628 = vmatprep.subr.mxu0 0.0
    %629 = vmatpush1.msra.mxu0 0.0
    %630 = vmatprep.subr.mxu0 0.0
    %631 = vmatpush1.msra.mxu0 0.0
    %632 = vmatprep.subr.mxu0 0.0
    %633 = vmatpush1.msra.mxu0 0.0
    %634 = vmatprep.subr.mxu0 0.0
    %635 = vmatpush1.msra.mxu0 0.0
    %636 = vmatprep.subr.mxu0 0.0
    %637 = vmatpush1.msra.mxu0 0.0
    %638 = vmatprep.subr.mxu0 0.0
    %639 = vmatpush1.msra.mxu0 0.0
    %640 = vmatprep.subr.mxu0 0.0
    %641 = vmatpush1.msra.mxu0 0.0
    %642 = vmatprep.subr.mxu0 0.0
    %643 = vmatpush1.msra.mxu0 0.0
    %644 = vmatprep.subr.mxu0 0.0
    %645 = vmatpush1.msra.mxu0 0.0
    %646 = vmatprep.subr.mxu0 0.0
    %647 = vmatpush1.msra.mxu0 0.0
    %648 = vmatprep.subr.mxu0 0.0
    %649 = vmatpush1.msra.mxu0 0.0
    %650 = vmatprep.subr.mxu0 0.0
    %651 = vmatpush1.msra.mxu0 0.0
    %652 = vmatprep.subr.mxu0 0.0
    %653 = vmatpush1.msra.mxu0 0.0
    %654 = vmatprep.subr.mxu0 0.0
    %655 = vmatpush1.msra.mxu0 0.0
    %656 = vmatprep.subr.mxu0 0.0
    %657 = vmatpush1.msra.mxu0 0.0
    %658 = vmatprep.subr.mxu0 0.0
    %659 = vmatpush1.msra.mxu0 0.0
    %660 = vmatprep.subr.mxu0 0.0
    %661 = vmatpush1.msra.mxu0 0.0
    %662 = vmatprep.subr.mxu0 0.0
    %663 = vmatpush1.msra.mxu0 0.0
    %664 = vmatprep.subr.mxu0 0.0
    %665 = vmatpush1.msra.mxu0 0.0
    %666 = vmatprep.subr.mxu0 0.0
    %667 = vmatpush1.msra.mxu0 0.0
    %668 = vmatprep.subr.mxu0 0.0
    %669 = vmatpush1.msra.mxu0 0.0
    %670 = vmatprep.subr.mxu0 0.0
    %671 = vmatpush1.msra.mxu0 0.0
    %672 = vmatprep.subr.mxu0 0.0
    %673 = vmatpush1.msra.mxu0 0.0
    %674 = vmatprep.subr.mxu0 0.0
    %675 = vmatpush1.msra.mxu0 0.0
    %676 = vmatprep.subr.mxu0 0.0
    %677 = vmatpush1.msra.mxu0 0.0
    %678 = vmatprep.subr.mxu0 0.0
    %679 = vmatpush1.msra.mxu0 0.0
    %680 = vmatprep.mubr.f32.mxu0 0.0
    %681 = vmatmul.mubr.f32.gmra.mrb[0].mxu0 %v614
    %v682 = vpop.f32.mrb[0].mxu0
    %v683 = vadd.f32 0.0, %v682
    %v684 = vpop.f32.mrb[0].mxu0
    %685 = vdwg.mxu0
    %v687 = vrot.slane %v683, 1
    %v690 = vadd.f32 %v608, %v683
    %v691 = vadd.f32 %v609, %v687
    %v692 = vtanh.pop %v690
    %v693 = vtanh.pop %v691
    %694 = vst.msk [vmem:[#allocation2 + $0x6] sm:$0x1] %vm164, %v692
    %695 = vst.msk [vmem:[#allocation2 + $0xe] sm:$0x1] %vm164, %v693
    %v696 = vld [vmem:[#allocation2 + $0x7] sm:$0x1]
    %v697 = vld [vmem:[#allocation2 + $0xf] sm:$0x1]
    %v700 = vrot.slane %v693, 7
    %v701 = vsel %vm172, %v700, %v692
    %v702 = vsel %vm73, %v701, 0
    %704 = vmatprep.subr.mxu0 0.0
    %705 = vmatpush1.msra.mxu0 %v76
    %706 = vmatprep.subr.mxu0 0.0
    %707 = vmatpush1.msra.mxu0 %v77
    %708 = vmatprep.subr.mxu0 0.0
    %709 = vmatpush1.msra.mxu0 %v78
    %710 = vmatprep.subr.mxu0 0.0
    %711 = vmatpush1.msra.mxu0 %v79
    %712 = vmatprep.subr.mxu0 0.0
    %713 = vmatpush1.msra.mxu0 0.0
    %714 = vmatprep.subr.mxu0 0.0
    %715 = vmatpush1.msra.mxu0 0.0
    %716 = vmatprep.subr.mxu0 0.0
    %717 = vmatpush1.msra.mxu0 0.0
    %718 = vmatprep.subr.mxu0 0.0
    %719 = vmatpush1.msra.mxu0 0.0
    %720 = vmatprep.subr.mxu0 0.0
    %721 = vmatpush1.msra.mxu0 0.0
    %722 = vmatprep.subr.mxu0 0.0
    %723 = vmatpush1.msra.mxu0 0.0
    %724 = vmatprep.subr.mxu0 0.0
    %725 = vmatpush1.msra.mxu0 0.0
    %726 = vmatprep.subr.mxu0 0.0
    %727 = vmatpush1.msra.mxu0 0.0
    %728 = vmatprep.subr.mxu0 0.0
    %729 = vmatpush1.msra.mxu0 0.0
    %730 = vmatprep.subr.mxu0 0.0
    %731 = vmatpush1.msra.mxu0 0.0
    %732 = vmatprep.subr.mxu0 0.0
    %733 = vmatpush1.msra.mxu0 0.0
    %734 = vmatprep.subr.mxu0 0.0
    %735 = vmatpush1.msra.mxu0 0.0
    %736 = vmatprep.subr.mxu0 0.0
    %737 = vmatpush1.msra.mxu0 0.0
    %738 = vmatprep.subr.mxu0 0.0
    %739 = vmatpush1.msra.mxu0 0.0
    %740 = vmatprep.subr.mxu0 0.0
    %741 = vmatpush1.msra.mxu0 0.0
    %742 = vmatprep.subr.mxu0 0.0
    %743 = vmatpush1.msra.mxu0 0.0
    %744 = vmatprep.subr.mxu0 0.0
    %745 = vmatpush1.msra.mxu0 0.0
    %746 = vmatprep.subr.mxu0 0.0
    %747 = vmatpush1.msra.mxu0 0.0
    %748 = vmatprep.subr.mxu0 0.0
    %749 = vmatpush1.msra.mxu0 0.0
    %750 = vmatprep.subr.mxu0 0.0
    %751 = vmatpush1.msra.mxu0 0.0
    %752 = vmatprep.subr.mxu0 0.0
    %753 = vmatpush1.msra.mxu0 0.0
    %754 = vmatprep.subr.mxu0 0.0
    %755 = vmatpush1.msra.mxu0 0.0
    %756 = vmatprep.subr.mxu0 0.0
    %757 = vmatpush1.msra.mxu0 0.0
    %758 = vmatprep.subr.mxu0 0.0
    %759 = vmatpush1.msra.mxu0 0.0
    %760 = vmatprep.subr.mxu0 0.0
    %761 = vmatpush1.msra.mxu0 0.0
    %762 = vmatprep.subr.mxu0 0.0
    %763 = vmatpush1.msra.mxu0 0.0
    %764 = vmatprep.subr.mxu0 0.0
    %765 = vmatpush1.msra.mxu0 0.0
    %766 = vmatprep.subr.mxu0 0.0
    %767 = vmatpush1.msra.mxu0 0.0
    %768 = vmatprep.mubr.f32.mxu0 0.0
    %769 = vmatmul.mubr.f32.gmra.mrb[0].mxu0 %v702
    %v770 = vpop.f32.mrb[0].mxu0
    %v771 = vadd.f32 0.0, %v770
    %v772 = vpop.f32.mrb[0].mxu0
    %773 = vdwg.mxu0
    %v775 = vrot.slane %v771, 1
    %v778 = vadd.f32 %v696, %v771
    %v779 = vadd.f32 %v697, %v775
    %v780 = vtanh.pop %v778
    %v781 = vtanh.pop %v779
    %782 = vst.msk [vmem:[#allocation2 + $0x7] sm:$0x1] %vm164, %v780
    %783 = vst.msk [vmem:[#allocation2 + $0xf] sm:$0x1] %vm164, %v781
    %v786 = vrot.slane %v781, 7
    %v787 = vsel %vm172, %v786, %v780
    %vm789 = vcmask 254976
    %790 = vst.msk [vmem:[#allocation8] sm:$0x3] %vm789, %v787
    %v791 = vld [vmem:[#allocation2] sm:$0xff]
    %v792 = vld [vmem:[#allocation2 + $0x8] sm:$0xff]
    %v793 = vld [vmem:[%s5] sm:$0x1]
    %v795 = vlaneseq
    %v796 = vshrl.u32 %v795, 7
    %v797 = vsub.s32 0, %v796
    %v798 = vrot.slane %v793, %v797
    %v800 = vmul.f32 %v791, %v798
    %v801 = vmul.f32 %v792, %v798
    %v802 = vsel %vm73, %v800, 0.0
    %803 = vadd.xlane.f32.xlu0 %v802
    %v804 = vpop.xlane.xlu0 %803
    %v805 = vsel %vm73, %v801, 0.0
    %806 = vadd.xlane.f32.xlu0 %v805
    %v807 = vpop.xlane.xlu0 %806
    %s808 = sld [smem:[#allocation3]]
    %v809 = vstv %s808
    %v810 = vadd.f32 %v804, %v809
    %v811 = vadd.f32 %v807, %v809
    %v814 = vlaneseq
    %v815 = vand.u32 %v814, 127
    %v816 = vlaneseq
    %v817 = vshrl.u32 %v816, 7
    %v818 = vsub.s32 %v815, %v817
    %v819 = vrot.slane %v810, %v818
    %v820 = vlaneseq
    %v821 = vshrl.u32 %v820, 7
    %v822 = vsub.s32 %v815, %v821
    %v823 = vrot.slane %v811, %v822
    %v824 = vsel %vm172, %v823, %v819
    %vm826 = vcmask 58368
    %827 = vst.msk [vmem:[#allocation7] sm:$0x3] %vm826, %v824
    // Predicated region
    $region34: #{tpu_custom_call.1} parent=1 // pred_check
      _
    $region35: #{tpu_custom_call.1} parent=1 // pred_check_branch
      %829 = sbr.rel (0) target = $region37
    $region36: #{tpu_custom_call.1} parent=1 // pred_region
      %s831 = ssub.s32 32, 32
      %832 = vsyncadd [#allocation6], %s831
      %s834 = sshll.u32 [#allocation7], 4
      %s835 = int_to_ptr.vmem [resolvable:$true] %s834
      %837 = dma.vmem_to_hbm [thread:$0]  %s835, 32, %s7, [#allocation6]
    $region37: #{tpu_custom_call.1} parent=1 // pred_fallthru
      _
    // Predicated region
    $region38: #{tpu_custom_call.1} parent=1 // pred_check
      _
    $region39: #{tpu_custom_call.1} parent=1 // pred_check_branch
      %839 = sbr.rel (0) target = $region41
    $region40: #{tpu_custom_call.1} parent=1 // pred_region
      %s841 = ssub.s32 32, 32
      %842 = vsyncadd [#allocation9], %s841
      %s844 = sshll.u32 [#allocation8], 4
      %s845 = int_to_ptr.vmem [resolvable:$true] %s844
      %847 = dma.vmem_to_hbm [thread:$0]  %s845, 32, %s8, [#allocation9]
    $region41: #{tpu_custom_call.1} parent=1 // pred_fallthru
      _
    // Predicated region
    $region42: #{tpu_custom_call.1} parent=1 // pred_check
      _
    $region43: #{tpu_custom_call.1} parent=1 // pred_check_branch
      %849 = sbr.rel (0) target = $region45
    $region44: #{tpu_custom_call.1} parent=1 // pred_region
      %850 = dma.done [#allocation6], 32
    $region45: #{tpu_custom_call.1} parent=1 // pred_fallthru
      _
    // Predicated region
    $region46: #{tpu_custom_call.1} parent=1 // pred_check
      _
    $region47: #{tpu_custom_call.1} parent=1 // pred_check_branch
      %852 = sbr.rel (0) target = $region49
    $region48: #{tpu_custom_call.1} parent=1 // pred_region
      %853 = dma.done [#allocation9], 32
    $region49: #{tpu_custom_call.1} parent=1 // pred_fallthru
      _
    %854 = vsyncpa [#allocation5], 1
    %855 = vsyncpa [#allocation6], 1
    %856 = vsyncpa [#allocation9], 1

</llo_original>
